<compile_context>
chip_gen: v7x
topology: tpu7x:2x2x1
jax: 0.10.0
libtpu: 0.0.40
codegen_flags: <defaults>
</compile_context>

<pallas_src>
import jax
import jax.numpy as jnp
from jax.experimental import pallas as pl
from jax.experimental.pallas import tpu as pltpu

# ---- packed-parameter slab layout (rows of a (176, 128) fp32 array) -------
_D_IN, _H1, _H2, _D_OUT = 48, 50, 40, 3

_W1_R0, _W1_ROWS = 0, 48          # w1: valid (48, 50)
_W2_R0, _W2_ROWS = 48, 56         # w2: valid (50, 40), rows 50..55 zero
_W3_R0, _W3_ROWS = 104, 48        # w3: valid (40, 3),  rows 40..47 zero
_B1_R = 152                       # b1 replicated across 8 rows, pad lanes 0
_B2_R = 160                       # b2 replicated across 8 rows, pad lanes 0
_B3_R = 168                       # b3 replicated across 8 rows, pad lanes -1e30
_SLAB_ROWS = 176
_NEG_BIG = -1e30                  # masks padded logit lanes in log-softmax


def mlp_kernel(x_ref, p_ref, o_ref):
    # Whole problem fits in VMEM; single un-gridded invocation, 2 input DMAs.
    nb = x_ref.shape[0]                               # static batch size
    x = x_ref[...]                                    # (B, 48)

    w1 = p_ref[_W1_R0:_W1_R0 + _W1_ROWS, :]           # (48, 128), valid (48, 50)
    w2 = p_ref[_W2_R0:_W2_R0 + _W2_ROWS, :]           # (56, 128), valid (50, 40)
    w3 = p_ref[_W3_R0:_W3_R0 + _W3_ROWS, :]           # (48, 128), valid (40, 3)

    if nb <= 8:
        # Biases are pre-replicated across their 8-row blocks, so this is a
        # plain static load of (B, 128) -> pure VPU add, no sublane broadcast.
        b1 = p_ref[_B1_R:_B1_R + nb, :]
        b2 = p_ref[_B2_R:_B2_R + nb, :]
        b3 = p_ref[_B3_R:_B3_R + nb, :]
    else:
        b1 = p_ref[_B1_R:_B1_R + 1, :]                # fallback: broadcast add
        b2 = p_ref[_B2_R:_B2_R + 1, :]
        b3 = p_ref[_B3_R:_B3_R + 1, :]

    # layer1 + ReLU (padded lanes stay exactly 0)
    h1 = jnp.maximum(jnp.dot(x, w1, preferred_element_type=jnp.float32) + b1, 0.0)
    # layer2 + ReLU: contract only over the 56 lanes matching w2's stored rows
    # (lanes 50..55 of h1 and rows 50..55 of w2 are zero, so this is exact).
    h2 = jnp.maximum(
        jnp.dot(h1[:, :_W2_ROWS], w2, preferred_element_type=jnp.float32) + b2, 0.0)
    # layer3: padded lanes become ~-1e30 via the bias, so the full-width
    # log-softmax reduction below is exact on the 3 valid lanes.
    z = jnp.dot(h2[:, :_W3_ROWS], w3, preferred_element_type=jnp.float32) + b3

    m = jnp.max(z, axis=-1, keepdims=True)
    s = z - m
    lse = jnp.log(jnp.sum(jnp.exp(s), axis=-1, keepdims=True))
    o_ref[...] = s - lse                              # lane-dense (B, 128) store


def pack_params(params):
    """Pack (w1,b1,w2,b2,w3,b3) into one (8,128)-aligned (176,128) fp32 slab."""
    w1, b1, w2, b2, w3, b3 = params                   # weights stored (in, out)
    slab = jnp.zeros((_SLAB_ROWS, 128), jnp.float32)
    slab = slab.at[_W1_R0:_W1_R0 + _D_IN, :_H1].set(w1)
    slab = slab.at[_W2_R0:_W2_R0 + _H1, :_H2].set(w2)
    slab = slab.at[_W3_R0:_W3_R0 + _H2, :_D_OUT].set(w3)
    # biases replicated across their 8-row blocks (enables broadcast-free adds)
    slab = slab.at[_B1_R:_B1_R + 8, :_H1].set(jnp.tile(b1[None, :], (8, 1)))
    slab = slab.at[_B2_R:_B2_R + 8, :_H2].set(jnp.tile(b2[None, :], (8, 1)))
    b3_row = jnp.full((128,), _NEG_BIG, jnp.float32).at[:_D_OUT].set(b3)
    slab = slab.at[_B3_R:_B3_R + 8, :].set(jnp.tile(b3_row[None, :], (8, 1)))
    return slab


def _forward(x, param_slab):
    """x: (B, C, H, W) float32; param_slab: (176, 128); returns (B, 3) log-probs."""
    b = x.shape[0]
    x2d = x.reshape(b, -1).astype(jnp.float32)        # same as torch .view(B, -1)

    out_pad = pl.pallas_call(
        mlp_kernel,
        out_shape=jax.ShapeDtypeStruct((b, 128), jnp.float32),
        in_specs=[
            pl.BlockSpec(memory_space=pltpu.VMEM),    # x       (B, 48)
            pl.BlockSpec(memory_space=pltpu.VMEM),    # params  (176, 128)
        ],
        out_specs=pl.BlockSpec(memory_space=pltpu.VMEM),
        cost_estimate=pl.CostEstimate(
            flops=2 * b * (_D_IN * _H1 + _H1 * _H2 + _H2 * _D_OUT),
            transcendentals=b * (_D_OUT + 1),
            bytes_accessed=4 * (b * _D_IN + _SLAB_ROWS * 128 + b * 128),
        ),
    )(x2d, param_slab)
    return out_pad[:, :_D_OUT]


# jit so the packed slab (and compiled kernel) stay resident across calls;
# the kernel itself is launch-overhead bound, so avoiding re-dispatch work
# and re-staging of the slab dominates any in-kernel tuning.
neural_network_forward = jax.jit(_forward)


def init_params(key):
    """Deterministic PyTorch-style init: U(-1/sqrt(fan_in), 1/sqrt(fan_in))."""
    def linear(k, fan_in, fan_out):
        kw, kb = jax.random.split(k)
        bound = 1.0 / jnp.sqrt(jnp.float32(fan_in))
        # store weight as (in, out) == transpose of torch's (out, in)
        w = jax.random.uniform(kw, (fan_in, fan_out), jnp.float32, -bound, bound)
        bb = jax.random.uniform(kb, (fan_out,), jnp.float32, -bound, bound)
        return w, bb

    k1, k2, k3 = jax.random.split(key, 3)
    w1, b1 = linear(k1, _D_IN, _H1)
    w2, b2 = linear(k2, _H1, _H2)
    w3, b3 = linear(k3, _H2, _D_OUT)
    return (w1, b1, w2, b2, w3, b3)


def reference_forward(x, params):
    """Pure-JAX reference for correctness checking."""
    w1, b1, w2, b2, w3, b3 = params
    x2d = x.reshape(x.shape[0], -1)
    h1 = jax.nn.relu(x2d @ w1 + b1)
    h2 = jax.nn.relu(h1 @ w2 + b2)
    z = h2 @ w3 + b3
    return jax.nn.log_softmax(z, axis=1)


if __name__ == "__main__":
    key = jax.random.PRNGKey(0)
    kx, kp = jax.random.split(key)

    # (B, C, H, W) = (2, 3, 4, 4) -> flattened feature dim = 48 (matches Linear(48, 50))
    x = jax.random.normal(kx, (2, 3, 4, 4), jnp.float32)
    params = init_params(kp)
    slab = pack_params(params)

    out = neural_network_forward(x, slab)
    out = jax.block_until_ready(out)

    ref = reference_forward(x, params)
    assert out.shape == (2, 3)
    assert jnp.allclose(out, ref, atol=1e-5, rtol=1e-5), "mismatch vs reference"

    print("KERNEL_OK")
</pallas_src>

<mosaic_0001>
module attributes {stable_mosaic.version = 11 : i64} {
  func.func @mlp_kernel(%arg0: memref<2x48xf32, #tpu.memory_space<vmem>>, %arg1: memref<176x128xf32, #tpu.memory_space<vmem>>, %arg2: memref<2x128xf32, #tpu.memory_space<vmem>>) attributes {dimension_semantics = [], scalar_prefetch = 0 : i64, scratch_operands = 0 : i64, tpu.core_type = #tpu.core_type<tc>} {
    %c0 = arith.constant 0 : index
    %c0_0 = arith.constant 0 : index
    %0 = vector.load %arg0[%c0, %c0_0] : memref<2x48xf32, #tpu.memory_space<vmem>>, vector<2x48xf32>
    %c0_1 = arith.constant 0 : index
    %c0_2 = arith.constant 0 : index
    %1 = vector.load %arg1[%c0_1, %c0_2] : memref<176x128xf32, #tpu.memory_space<vmem>>, vector<48x128xf32>
    %c48 = arith.constant 48 : index
    %c0_3 = arith.constant 0 : index
    %2 = vector.load %arg1[%c48, %c0_3] : memref<176x128xf32, #tpu.memory_space<vmem>>, vector<56x128xf32>
    %c104 = arith.constant 104 : index
    %c0_4 = arith.constant 0 : index
    %3 = vector.load %arg1[%c104, %c0_4] : memref<176x128xf32, #tpu.memory_space<vmem>>, vector<48x128xf32>
    %c152 = arith.constant 152 : index
    %c0_5 = arith.constant 0 : index
    %4 = vector.load %arg1[%c152, %c0_5] : memref<176x128xf32, #tpu.memory_space<vmem>>, vector<2x128xf32>
    %c160 = arith.constant 160 : index
    %c0_6 = arith.constant 0 : index
    %5 = vector.load %arg1[%c160, %c0_6] : memref<176x128xf32, #tpu.memory_space<vmem>>, vector<2x128xf32>
    %c168 = arith.constant 168 : index
    %c0_7 = arith.constant 0 : index
    %6 = vector.load %arg1[%c168, %c0_7] : memref<176x128xf32, #tpu.memory_space<vmem>>, vector<2x128xf32>
    %cst = arith.constant dense<0.000000e+00> : vector<2x128xf32>
    %7 = tpu.matmul %0, %1, %cst {dimension_numbers = #tpu.dot_dimension_numbers<[1], [0], [0], [1], [0, 0, 1, 1], [], []>} : vector<2x48xf32>, vector<48x128xf32>, vector<2x128xf32> -> vector<2x128xf32>
    %8 = arith.addf %7, %4 : vector<2x128xf32>
    %cst_8 = arith.constant 0.000000e+00 : f32
    %9 = vector.broadcast %cst_8 : f32 to vector<2x128xf32>
    %10 = arith.maximumf %8, %9 : vector<2x128xf32>
    %11 = vector.extract_strided_slice %10 {offsets = [0, 0], sizes = [2, 56], strides = [1, 1]} : vector<2x128xf32> to vector<2x56xf32>
    %cst_9 = arith.constant dense<0.000000e+00> : vector<2x128xf32>
    %12 = tpu.matmul %11, %2, %cst_9 {dimension_numbers = #tpu.dot_dimension_numbers<[1], [0], [0], [1], [0, 0, 1, 1], [], []>} : vector<2x56xf32>, vector<56x128xf32>, vector<2x128xf32> -> vector<2x128xf32>
    %13 = arith.addf %12, %5 : vector<2x128xf32>
    %cst_10 = arith.constant 0.000000e+00 : f32
    %14 = vector.broadcast %cst_10 : f32 to vector<2x128xf32>
    %15 = arith.maximumf %13, %14 : vector<2x128xf32>
    %16 = vector.extract_strided_slice %15 {offsets = [0, 0], sizes = [2, 48], strides = [1, 1]} : vector<2x128xf32> to vector<2x48xf32>
    %cst_11 = arith.constant dense<0.000000e+00> : vector<2x128xf32>
    %17 = tpu.matmul %16, %3, %cst_11 {dimension_numbers = #tpu.dot_dimension_numbers<[1], [0], [0], [1], [0, 0, 1, 1], [], []>} : vector<2x48xf32>, vector<48x128xf32>, vector<2x128xf32> -> vector<2x128xf32>
    %18 = arith.addf %17, %6 : vector<2x128xf32>
    %cst_12 = arith.constant dense<0xFF800000> : vector<2xf32>
    %19 = vector.multi_reduction <maximumf>, %18, %cst_12 [1] : vector<2x128xf32> to vector<2xf32>
    %20 = vector.shape_cast %19 : vector<2xf32> to vector<2x1xf32>
    %21 = vector.broadcast %20 : vector<2x1xf32> to vector<2x128xf32>
    %22 = arith.subf %18, %21 : vector<2x128xf32>
    %23 = math.exp %22 : vector<2x128xf32>
    %cst_13 = arith.constant dense<0.000000e+00> : vector<2xf32>
    %24 = vector.multi_reduction <add>, %23, %cst_13 [1] : vector<2x128xf32> to vector<2xf32>
    %25 = vector.shape_cast %24 : vector<2xf32> to vector<2x1xf32>
    %26 = math.log %25 : vector<2x1xf32>
    %27 = vector.broadcast %26 : vector<2x1xf32> to vector<2x128xf32>
    %28 = arith.subf %22, %27 : vector<2x128xf32>
    %c0_14 = arith.constant 0 : index
    %c0_15 = arith.constant 0 : index
    %29 = vector.load %arg2[%c0_14, %c0_15] : memref<2x128xf32, #tpu.memory_space<vmem>>, vector<2x128xf32>
    tpu.vector_store %arg2[%c0_14, %c0_15], %28 {strides = array<i32>} : memref<2x128xf32, #tpu.memory_space<vmem>>, vector<2x128xf32>,
    return
  }
}

</mosaic_0001>

<llo_original>
// kernel: _forward.1
$region0: #{_forward.1}
  #allocation0 [shape = 'u32[]', space=smem, size = 0x4, offset = 0x4, fixed_abs, tag = 'smem constant byte address 0x4 - core index']
  #allocation1 [shape = 'u32[144,128]{1,0:T(1,128)}', space=vmem, size = 0x12000, scoped, tag = 'internal scratch']
  %s0 = inlined_call_operand.vmem [shape: f32[2,48], index: 0, kind: input, shape index: {}]
  %s1 = inlined_call_operand.hbm [shape: f32[176,128], index: 1, kind: input, shape index: {}]
  %s2 = inlined_call_operand.hbm [shape: f32[2,128], index: 2, kind: output, shape index: {}]
  %s3 = sld [smem:[#allocation0]]
  $region22: #{_forward.1} parent=0
    _
  %s5 = ssub.s32 1, %s3
  %s6 = scalar_select 0, %s5, %s3
  $region1: #{_forward.1} parent=0
    #allocation2 [shape = 'u8[90112]{0}', space=vmem, size = 0x16000, scoped, tag = 'input window, operand 1, single buffered']
    #allocation3 [shape = 's32[1]{0}', space=sflag, size = 0x4, scoped, tag = 'scoped memory for _forward.1']
    #allocation4 [shape = 's32[1]{0}', space=sflag, size = 0x4, scoped, tag = 'scoped memory for _forward.1']
    #allocation5 [shape = 'u8[1024]{0}', space=vmem, size = 0x400, scoped, tag = 'output window, operand 0, single buffered']
    %7 = vsyncpa [#allocation3], 0
    %8 = vsyncpa [#allocation4], 0
    // Predicated region
    $region2: #{_forward.1} parent=1 // pred_check
      _
    $region3: #{_forward.1} parent=1 // pred_check_branch
      %10 = sbr.rel (0) target = $region5
    $region4: #{_forward.1} parent=1 // pred_region
      _
    $region5: #{_forward.1} parent=1 // pred_fallthru
      _
    // Predicated region
    $region6: #{_forward.1} parent=1 // pred_check
      _
    $region7: #{_forward.1} parent=1 // pred_check_branch
      %12 = sbr.rel (0) target = $region9
    $region8: #{_forward.1} parent=1 // pred_region
      %s14 = ssub.s32 2816, 2816
      %15 = vsyncadd [#allocation3], %s14
      %s16 = sshll.u32 [#allocation2], 4
      %s17 = int_to_ptr.vmem [resolvable:$true] %s16
      %22 = dma.hbm_to_vmem [thread:$0]  %s1, 2816, %s17, [#allocation3], 128, 128, 8
    $region9: #{_forward.1} parent=1 // pred_fallthru
      _
    // Predicated region
    $region10: #{_forward.1} parent=1 // pred_check
      _
    $region11: #{_forward.1} parent=1 // pred_check_branch
      %24 = sbr.rel (0) target = $region13
    $region12: #{_forward.1} parent=1 // pred_region
      %25 = dma.done [#allocation3], 2816
    $region13: #{_forward.1} parent=1 // pred_fallthru
      _
    %v26 = vld [vmem:[%s0] sm:$0x3]
    %v27 = vld [vmem:[#allocation2] sm:$0xff]
    %v28 = vld [vmem:[#allocation2 + $0x8] sm:$0xff]
    %v29 = vld [vmem:[#allocation2 + $0x10] sm:$0xff]
    %v30 = vld [vmem:[#allocation2 + $0x18] sm:$0xff]
    %v31 = vld [vmem:[#allocation2 + $0x20] sm:$0xff]
    %v32 = vld [vmem:[#allocation2 + $0x28] sm:$0xff]
    %v33 = vld [vmem:[#allocation2 + $0x30] sm:$0xff]
    %v34 = vld [vmem:[#allocation2 + $0x38] sm:$0xff]
    %v35 = vld [vmem:[#allocation2 + $0x40] sm:$0xff]
    %v36 = vld [vmem:[#allocation2 + $0x48] sm:$0xff]
    %v37 = vld [vmem:[#allocation2 + $0x50] sm:$0xff]
    %v38 = vld [vmem:[#allocation2 + $0x58] sm:$0xff]
    %v39 = vld [vmem:[#allocation2 + $0x60] sm:$0xff]
    %v40 = vld [vmem:[#allocation2 + $0x68] sm:$0xff]
    %v41 = vld [vmem:[#allocation2 + $0x70] sm:$0xff]
    %v42 = vld [vmem:[#allocation2 + $0x78] sm:$0xff]
    %v43 = vld [vmem:[#allocation2 + $0x80] sm:$0xff]
    %v44 = vld [vmem:[#allocation2 + $0x88] sm:$0xff]
    %v45 = vld [vmem:[#allocation2 + $0x90] sm:$0xff]
    %v46 = vld [vmem:[#allocation2 + $0x98] sm:$0x3]
    %v47 = vld [vmem:[#allocation2 + $0xa0] sm:$0x3]
    %v48 = vld [vmem:[#allocation2 + $0xa8] sm:$0x3]
    %vm49 = vcmask 392192
    %v51 = vsel %vm49, %v26, 0
    %53 = vmatprep.subr.mxu0 0.0
    %54 = vmatpush1.msra.mxu0 %v27
    %55 = vmatprep.subr.mxu0 0.0
    %56 = vmatpush1.msra.mxu0 %v28
    %57 = vmatprep.subr.mxu0 0.0
    %58 = vmatpush1.msra.mxu0 %v29
    %59 = vmatprep.subr.mxu0 0.0
    %60 = vmatpush1.msra.mxu0 %v30
    %61 = vmatprep.subr.mxu0 0.0
    %62 = vmatpush1.msra.mxu0 %v31
    %63 = vmatprep.subr.mxu0 0.0
    %64 = vmatpush1.msra.mxu0 %v32
    %65 = vmatprep.subr.mxu0 0.0
    %66 = vmatpush1.msra.mxu0 0.0
    %67 = vmatprep.subr.mxu0 0.0
    %68 = vmatpush1.msra.mxu0 0.0
    %69 = vmatprep.subr.mxu0 0.0
    %70 = vmatpush1.msra.mxu0 0.0
    %71 = vmatprep.subr.mxu0 0.0
    %72 = vmatpush1.msra.mxu0 0.0
    %73 = vmatprep.subr.mxu0 0.0
    %74 = vmatpush1.msra.mxu0 0.0
    %75 = vmatprep.subr.mxu0 0.0
    %76 = vmatpush1.msra.mxu0 0.0
    %77 = vmatprep.subr.mxu0 0.0
    %78 = vmatpush1.msra.mxu0 0.0
    %79 = vmatprep.subr.mxu0 0.0
    %80 = vmatpush1.msra.mxu0 0.0
    %81 = vmatprep.subr.mxu0 0.0
    %82 = vmatpush1.msra.mxu0 0.0
    %83 = vmatprep.subr.mxu0 0.0
    %84 = vmatpush1.msra.mxu0 0.0
    %85 = vmatprep.subr.mxu0 0.0
    %86 = vmatpush1.msra.mxu0 0.0
    %87 = vmatprep.subr.mxu0 0.0
    %88 = vmatpush1.msra.mxu0 0.0
    %89 = vmatprep.subr.mxu0 0.0
    %90 = vmatpush1.msra.mxu0 0.0
    %91 = vmatprep.subr.mxu0 0.0
    %92 = vmatpush1.msra.mxu0 0.0
    %93 = vmatprep.subr.mxu0 0.0
    %94 = vmatpush1.msra.mxu0 0.0
    %95 = vmatprep.subr.mxu0 0.0
    %96 = vmatpush1.msra.mxu0 0.0
    %97 = vmatprep.subr.mxu0 0.0
    %98 = vmatpush1.msra.mxu0 0.0
    %99 = vmatprep.subr.mxu0 0.0
    %100 = vmatpush1.msra.mxu0 0.0
    %101 = vmatprep.subr.mxu0 0.0
    %102 = vmatpush1.msra.mxu0 0.0
    %103 = vmatprep.subr.mxu0 0.0
    %104 = vmatpush1.msra.mxu0 0.0
    %105 = vmatprep.subr.mxu0 0.0
    %106 = vmatpush1.msra.mxu0 0.0
    %107 = vmatprep.subr.mxu0 0.0
    %108 = vmatpush1.msra.mxu0 0.0
    %109 = vmatprep.subr.mxu0 0.0
    %110 = vmatpush1.msra.mxu0 0.0
    %111 = vmatprep.subr.mxu0 0.0
    %112 = vmatpush1.msra.mxu0 0.0
    %113 = vmatprep.subr.mxu0 0.0
    %114 = vmatpush1.msra.mxu0 0.0
    %115 = vmatprep.subr.mxu0 0.0
    %116 = vmatpush1.msra.mxu0 0.0
    %117 = vmatprep.mubr.f32.mxu0 0.0
    %118 = vmatmul.mubr.f32.gmra.mrb[0].mxu0 %v51
    %v119 = vpop.f32.mrb[0].mxu0
    %v120 = vadd.f32 %v46, %v119
    %v121 = vpop.f32.mrb[0].mxu0
    %122 = vdwg.mxu0
    %v123 = vmax.f32 %v120, 0.0
    %vm124 = vcmask 457728
    %v126 = vsel %vm124, %v123, 0
    %128 = vmatprep.subr.mxu0 0.0
    %129 = vmatpush1.msra.mxu0 %v33
    %130 = vmatprep.subr.mxu0 0.0
    %131 = vmatpush1.msra.mxu0 %v34
    %132 = vmatprep.subr.mxu0 0.0
    %133 = vmatpush1.msra.mxu0 %v35
    %134 = vmatprep.subr.mxu0 0.0
    %135 = vmatpush1.msra.mxu0 %v36
    %136 = vmatprep.subr.mxu0 0.0
    %137 = vmatpush1.msra.mxu0 %v37
    %138 = vmatprep.subr.mxu0 0.0
    %139 = vmatpush1.msra.mxu0 %v38
    %140 = vmatprep.subr.mxu0 0.0
    %141 = vmatpush1.msra.mxu0 %v39
    %142 = vmatprep.subr.mxu0 0.0
    %143 = vmatpush1.msra.mxu0 0.0
    %144 = vmatprep.subr.mxu0 0.0
    %145 = vmatpush1.msra.mxu0 0.0
    %146 = vmatprep.subr.mxu0 0.0
    %147 = vmatpush1.msra.mxu0 0.0
    %148 = vmatprep.subr.mxu0 0.0
    %149 = vmatpush1.msra.mxu0 0.0
    %150 = vmatprep.subr.mxu0 0.0
    %151 = vmatpush1.msra.mxu0 0.0
    %152 = vmatprep.subr.mxu0 0.0
    %153 = vmatpush1.msra.mxu0 0.0
    %154 = vmatprep.subr.mxu0 0.0
    %155 = vmatpush1.msra.mxu0 0.0
    %156 = vmatprep.subr.mxu0 0.0
    %157 = vmatpush1.msra.mxu0 0.0
    %158 = vmatprep.subr.mxu0 0.0
    %159 = vmatpush1.msra.mxu0 0.0
    %160 = vmatprep.subr.mxu0 0.0
    %161 = vmatpush1.msra.mxu0 0.0
    %162 = vmatprep.subr.mxu0 0.0
    %163 = vmatpush1.msra.mxu0 0.0
    %164 = vmatprep.subr.mxu0 0.0
    %165 = vmatpush1.msra.mxu0 0.0
    %166 = vmatprep.subr.mxu0 0.0
    %167 = vmatpush1.msra.mxu0 0.0
    %168 = vmatprep.subr.mxu0 0.0
    %169 = vmatpush1.msra.mxu0 0.0
    %170 = vmatprep.subr.mxu0 0.0
    %171 = vmatpush1.msra.mxu0 0.0
    %172 = vmatprep.subr.mxu0 0.0
    %173 = vmatpush1.msra.mxu0 0.0
    %174 = vmatprep.subr.mxu0 0.0
    %175 = vmatpush1.msra.mxu0 0.0
    %176 = vmatprep.subr.mxu0 0.0
    %177 = vmatpush1.msra.mxu0 0.0
    %178 = vmatprep.subr.mxu0 0.0
    %179 = vmatpush1.msra.mxu0 0.0
    %180 = vmatprep.subr.mxu0 0.0
    %181 = vmatpush1.msra.mxu0 0.0
    %182 = vmatprep.subr.mxu0 0.0
    %183 = vmatpush1.msra.mxu0 0.0
    %184 = vmatprep.subr.mxu0 0.0
    %185 = vmatpush1.msra.mxu0 0.0
    %186 = vmatprep.subr.mxu0 0.0
    %187 = vmatpush1.msra.mxu0 0.0
    %188 = vmatprep.subr.mxu0 0.0
    %189 = vmatpush1.msra.mxu0 0.0
    %190 = vmatprep.subr.mxu0 0.0
    %191 = vmatpush1.msra.mxu0 0.0
    %192 = vmatprep.mubr.f32.mxu0 0.0
    %193 = vmatmul.mubr.f32.gmra.mrb[0].mxu0 %v126
    %v194 = vpop.f32.mrb[0].mxu0
    %v195 = vadd.f32 %v47, %v194
    %v196 = vpop.f32.mrb[0].mxu0
    %197 = vdwg.mxu0
    %v198 = vmax.f32 %v195, 0.0
    %v200 = vsel %vm49, %v198, 0
    %202 = vmatprep.subr.mxu0 0.0
    %203 = vmatpush1.msra.mxu0 %v40
    %204 = vmatprep.subr.mxu0 0.0
    %205 = vmatpush1.msra.mxu0 %v41
    %206 = vmatprep.subr.mxu0 0.0
    %207 = vmatpush1.msra.mxu0 %v42
    %208 = vmatprep.subr.mxu0 0.0
    %209 = vmatpush1.msra.mxu0 %v43
    %210 = vmatprep.subr.mxu0 0.0
    %211 = vmatpush1.msra.mxu0 %v44
    %212 = vmatprep.subr.mxu0 0.0
    %213 = vmatpush1.msra.mxu0 %v45
    %214 = vmatprep.subr.mxu0 0.0
    %215 = vmatpush1.msra.mxu0 0.0
    %216 = vmatprep.subr.mxu0 0.0
    %217 = vmatpush1.msra.mxu0 0.0
    %218 = vmatprep.subr.mxu0 0.0
    %219 = vmatpush1.msra.mxu0 0.0
    %220 = vmatprep.subr.mxu0 0.0
    %221 = vmatpush1.msra.mxu0 0.0
    %222 = vmatprep.subr.mxu0 0.0
    %223 = vmatpush1.msra.mxu0 0.0
    %224 = vmatprep.subr.mxu0 0.0
    %225 = vmatpush1.msra.mxu0 0.0
    %226 = vmatprep.subr.mxu0 0.0
    %227 = vmatpush1.msra.mxu0 0.0
    %228 = vmatprep.subr.mxu0 0.0
    %229 = vmatpush1.msra.mxu0 0.0
    %230 = vmatprep.subr.mxu0 0.0
    %231 = vmatpush1.msra.mxu0 0.0
    %232 = vmatprep.subr.mxu0 0.0
    %233 = vmatpush1.msra.mxu0 0.0
    %234 = vmatprep.subr.mxu0 0.0
    %235 = vmatpush1.msra.mxu0 0.0
    %236 = vmatprep.subr.mxu0 0.0
    %237 = vmatpush1.msra.mxu0 0.0
    %238 = vmatprep.subr.mxu0 0.0
    %239 = vmatpush1.msra.mxu0 0.0
    %240 = vmatprep.subr.mxu0 0.0
    %241 = vmatpush1.msra.mxu0 0.0
    %242 = vmatprep.subr.mxu0 0.0
    %243 = vmatpush1.msra.mxu0 0.0
    %244 = vmatprep.subr.mxu0 0.0
    %245 = vmatpush1.msra.mxu0 0.0
    %246 = vmatprep.subr.mxu0 0.0
    %247 = vmatpush1.msra.mxu0 0.0
    %248 = vmatprep.subr.mxu0 0.0
    %249 = vmatpush1.msra.mxu0 0.0
    %250 = vmatprep.subr.mxu0 0.0
    %251 = vmatpush1.msra.mxu0 0.0
    %252 = vmatprep.subr.mxu0 0.0
    %253 = vmatpush1.msra.mxu0 0.0
    %254 = vmatprep.subr.mxu0 0.0
    %255 = vmatpush1.msra.mxu0 0.0
    %256 = vmatprep.subr.mxu0 0.0
    %257 = vmatpush1.msra.mxu0 0.0
    %258 = vmatprep.subr.mxu0 0.0
    %259 = vmatpush1.msra.mxu0 0.0
    %260 = vmatprep.subr.mxu0 0.0
    %261 = vmatpush1.msra.mxu0 0.0
    %262 = vmatprep.subr.mxu0 0.0
    %263 = vmatpush1.msra.mxu0 0.0
    %264 = vmatprep.subr.mxu0 0.0
    %265 = vmatpush1.msra.mxu0 0.0
    %266 = vmatprep.mubr.f32.mxu0 0.0
    %267 = vmatmul.mubr.f32.gmra.mrb[0].mxu0 %v200
    %v268 = vpop.f32.mrb[0].mxu0
    %v269 = vadd.f32 %v48, %v268
    %v270 = vpop.f32.mrb[0].mxu0
    %271 = vdwg.mxu0
    %vm272 = vcmask 1041408
    %v273 = vsel %vm272, %v269, -inf
    %274 = vmax.xlane.f32.xlu0 %v273
    %v275 = vpop.xlane.xlu0 %274
    %v276 = vsub.f32 %v269, %v275
    %v277 = vmul.f32 %v276, 1.442695
    %v278 = vpow.pop %v277
    %v279 = vsel %vm272, %v278, 0.0
    %280 = vadd.xlane.f32.xlu0 %v279
    %v281 = vpop.xlane.xlu0 %280
    %v282 = vlog2.pop %v281
    %v283 = vmul.f32 %v282, 0.6931472
    %v284 = vsub.f32 %v276, %v283
    %285 = vst [vmem:[#allocation5] sm:$0x3] %v284
    // Predicated region
    $region14: #{_forward.1} parent=1 // pred_check
      _
    $region15: #{_forward.1} parent=1 // pred_check_branch
      %287 = sbr.rel (0) target = $region17
    $region16: #{_forward.1} parent=1 // pred_region
      %s289 = ssub.s32 32, 32
      %290 = vsyncadd [#allocation4], %s289
      %s292 = sshll.u32 [#allocation5], 4
      %s293 = int_to_ptr.vmem [resolvable:$true] %s292
      %295 = dma.vmem_to_hbm [thread:$0]  %s293, 32, %s2, [#allocation4]
    $region17: #{_forward.1} parent=1 // pred_fallthru
      _
    // Predicated region
    $region18: #{_forward.1} parent=1 // pred_check
      _
    $region19: #{_forward.1} parent=1 // pred_check_branch
      %297 = sbr.rel (0) target = $region21
    $region20: #{_forward.1} parent=1 // pred_region
      %298 = dma.done [#allocation4], 32
    $region21: #{_forward.1} parent=1 // pred_fallthru
      _
    %299 = vsyncpa [#allocation3], 1
    %300 = vsyncpa [#allocation4], 1

</llo_original>
